<compile_context>
chip_gen: v5e
topology: v5e:2x2
jax: 0.10.0
libtpu: 0.0.40
codegen_flags: <defaults>
</compile_context>

<pallas_src>
import functools

import jax
import jax.numpy as jnp
from jax.experimental import pallas as pl
from jax.experimental.pallas import tpu as pltpu

# ---- module "globals" (as in SEM_Faster/NeuralNetwork.py) -------------------
Lx = 1
Ly = 1
dim_inp = 2
dim_out = 2
K_DENS = 4           # -> k_x = k_y = 5, no_centres = 25
K_FUNC = "gaussian"  # one of: gaussian, matern32, matern52
N_POINTS = 64        # number of collocation points X


# ---- RBF kernel functions (pure-JAX, used by the reference) -----------------
def gaussian(x):
    return jnp.exp(-(x * x))


def matern32(x):
    s = 3.0 ** 0.5
    return (1.0 + s * x) * jnp.exp(-s * x)


def matern52(x):
    s = 5.0 ** 0.5
    return (1.0 + s * x + (5.0 / 3.0) * x * x) * jnp.exp(-s * x)


_KFUNCS = {"gaussian": gaussian, "matern32": matern32, "matern52": matern52}


# ---- Pallas kernel: distances -> RBF activation -> linear layer -------------
def rbfnn_kernel(xt_ref, p_ref, wb_ref, o_ref, *, k_func_name, n_centres, d_in):
    xt = xt_ref[...]                              # (D, TM)     f32, lane-dense
    p = p_ref[...]                                # (C, D+2)    packed per-centre params
    wb = wb_ref[...]                              # (d_out, C+1) packed [W | b]

    cmat = p[:, :d_in]                            # (C, D)
    csq = p[:, d_in:d_in + 1]                     # (C, 1)
    scale = p[:, d_in + 1:d_in + 2]               # (C, 1)

    # squared Euclidean distances via MXU:  d2^T = ||x||^2 + ||c||^2 - 2 c.x
    xsq = jnp.sum(xt * xt, axis=0, keepdims=True)                 # (1, TM)  VPU
    cx = jnp.dot(cmat, xt, preferred_element_type=jnp.float32)    # (C, TM)  MXU

    if k_func_name == "gaussian":
        # host-folded: cmat = 2*centres/w^2, csq = ||c||^2/w^2, scale = 1/w^2
        # -> arg == dist^2 / w^2 (clamped: MXU rewrite can go tiny-negative)
        arg = jnp.maximum(csq + scale * xsq - cx, 0.0)            # (C, TM)
        phi_t = jnp.exp(-arg)                                     # EUP, no sqrt
    else:
        # cmat = 2*centres, csq = ||c||^2, scale = 1/w
        dist_sq = jnp.maximum(csq + xsq - cx, 0.0)
        r = jnp.sqrt(dist_sq) * scale
        if k_func_name == "matern32":
            s = 3.0 ** 0.5
            phi_t = (1.0 + s * r) * jnp.exp(-s * r)
        else:  # matern52
            s = 5.0 ** 0.5
            phi_t = (1.0 + s * r + (5.0 / 3.0) * r * r) * jnp.exp(-s * r)

    # linear layer in transposed form: out^T = W @ phi^T + b  -> (d_out, TM)
    w = wb[:, :n_centres]                         # (d_out, C)
    bias = wb[:, n_centres:n_centres + 1]         # (d_out, 1)
    o_ref[...] = jnp.dot(w, phi_t, preferred_element_type=jnp.float32) + bias


def rbfnn_forward(X, centres, widths, W, b, *, k_func_name, tile_m=None):
    """X: (N, dim_inp). Returns (N, dim_out)."""
    n, d_in = X.shape
    n_centres = centres.shape[0]
    d_out = W.shape[0]

    # ---- one-time static parameter packing (centres/widths/W/b are fixed) ----
    inv_w = 1.0 / widths                                  # (C,)
    centres_sq = jnp.sum(centres * centres, axis=1)       # (C,)
    if k_func_name == "gaussian":
        inv_w2 = inv_w * inv_w
        cmat = (2.0 * inv_w2)[:, None] * centres          # (C, D)
        csq = (inv_w2 * centres_sq)[:, None]              # (C, 1)
        scale = inv_w2[:, None]                           # (C, 1)
    else:
        cmat = 2.0 * centres
        csq = centres_sq[:, None]
        scale = inv_w[:, None]
    params = jnp.concatenate([cmat, csq, scale], axis=1).astype(jnp.float32)   # (C, D+2)
    wb = jnp.concatenate([W, b[:, None]], axis=1).astype(jnp.float32)          # (d_out, C+1)

    # ---- row tiling: single block when launch-bound, capped tiles at large N ----
    if tile_m is None:
        tile_m = n if n <= 512 else 512                   # 512 keeps DMA hidden
    n_pad = ((n + tile_m - 1) // tile_m) * tile_m
    xt = X.T.astype(jnp.float32)                          # (D, N), lane-dense
    if n_pad != n:
        xt = jnp.pad(xt, ((0, 0), (0, n_pad - n)))        # padded rows discarded below

    kernel = functools.partial(rbfnn_kernel, k_func_name=k_func_name,
                               n_centres=n_centres, d_in=d_in)
    full = lambda i: (0, 0)   # grid-invariant operands: one full-array block

    out_t = pl.pallas_call(
        kernel,
        out_shape=jax.ShapeDtypeStruct((d_out, n_pad), jnp.float32),
        grid=(n_pad // tile_m,),
        in_specs=[
            pl.BlockSpec((d_in, tile_m), lambda i: (0, i)),          # X^T tile
            pl.BlockSpec((n_centres, d_in + 2), full),               # packed centre params
            pl.BlockSpec((d_out, n_centres + 1), full),              # packed [W | b]
        ],
        out_specs=pl.BlockSpec((d_out, tile_m), lambda i: (0, i)),   # out^T tile (lane-dense)
        compiler_params=pltpu.CompilerParams(
            dimension_semantics=("parallel",)                        # row axis has no reduction
        ),
    )(xt, params, wb)

    return out_t.T[:n]                                   # back to (N, dim_out)


# ---- parameter setup (glue, mirrors RBFLayer.setParameters) -----------------
def build_rbf_parameters(k_dens):
    k_x = int(Lx * k_dens + 1)
    k_y = int(Ly * k_dens + 1)
    no_centres = k_x * k_y

    centres = jnp.zeros((no_centres, dim_inp), jnp.float32)
    centres = centres.at[:, 0].set(
        jnp.repeat(jnp.linspace(0.0, float(Lx), k_x), k_y)
    )
    centres = centres.at[:, 1].set(
        jnp.tile(jnp.linspace(0.0, float(Ly), k_y), k_x)
    )

    # torch.cdist(centres, centres, p=2), max over dim=0, / sqrt(2*min(kx,ky))
    diff = centres[:, None, :] - centres[None, :, :]
    centre_distances = jnp.sqrt(jnp.sum(diff * diff, axis=-1))
    widths = jnp.max(centre_distances, axis=0) / (2 * min(k_x, k_y)) ** 0.5
    return centres, widths, no_centres


def reference_forward(X, centres, widths, W, b, k_func_name):
    size_diff = X[:, None, :] - centres[None, :, :]
    dist = jnp.sqrt(jnp.sum(size_diff * size_diff, axis=-1))
    phi = _KFUNCS[k_func_name](dist / widths[None, :])
    return phi @ W.T + b


if __name__ == "__main__":
    key = jax.random.PRNGKey(0)
    k_x_key, w_key, b_key = jax.random.split(key, 3)

    centres, widths, no_centres = build_rbf_parameters(K_DENS)

    # collocation points X in [0, Lx] x [0, Ly]
    X = jax.random.uniform(
        k_x_key, (N_POINTS, dim_inp), jnp.float32,
        minval=0.0, maxval=float(max(Lx, Ly)),
    )

    # deterministic Linear(no_centres, dim_out) init (uniform +-1/sqrt(fan_in), like torch)
    bound = 1.0 / (no_centres ** 0.5)
    W = jax.random.uniform(w_key, (dim_out, no_centres), jnp.float32,
                           minval=-bound, maxval=bound)
    b = jax.random.uniform(b_key, (dim_out,), jnp.float32,
                           minval=-bound, maxval=bound)

    out = rbfnn_forward(X, centres, widths, W, b, k_func_name=K_FUNC)
    out = jax.block_until_ready(out)

    ref = reference_forward(X, centres, widths, W, b, K_FUNC)
    assert out.shape == (N_POINTS, dim_out)
    assert jnp.allclose(out, ref, rtol=1e-4, atol=5e-5)

    print("KERNEL_OK")
</pallas_src>

<mosaic_0001>
module attributes {stable_mosaic.version = 11 : i64} {
  func.func @rbfnn_kernel(%arg0: i32, %arg1: memref<2x64xf32, #tpu.memory_space<vmem>>, %arg2: memref<25x4xf32, #tpu.memory_space<vmem>>, %arg3: memref<2x26xf32, #tpu.memory_space<vmem>>, %arg4: memref<2x64xf32, #tpu.memory_space<vmem>>) attributes {dimension_semantics = [#tpu.dimension_semantics<parallel>], iteration_bounds = array<i64: 1>, scalar_prefetch = 0 : i64, scratch_operands = 0 : i64, tpu.core_type = #tpu.core_type<tc>, window_params = [{transform_indices = @transform_0, window_bounds = array<i64: 2, 64>}, {pipeline_mode = #tpu.pipeline_mode<synchronous>, transform_indices = @transform_1, window_bounds = array<i64: 25, 4>}, {pipeline_mode = #tpu.pipeline_mode<synchronous>, transform_indices = @transform_2, window_bounds = array<i64: 2, 26>}, {transform_indices = @transform_3, window_bounds = array<i64: 2, 64>}]} {
    %c0 = arith.constant 0 : index
    %c0_0 = arith.constant 0 : index
    %0 = vector.load %arg1[%c0, %c0_0] : memref<2x64xf32, #tpu.memory_space<vmem>>, vector<2x64xf32>
    %c0_1 = arith.constant 0 : index
    %c0_2 = arith.constant 0 : index
    %1 = vector.load %arg2[%c0_1, %c0_2] : memref<25x4xf32, #tpu.memory_space<vmem>>, vector<25x4xf32>
    %c0_3 = arith.constant 0 : index
    %c0_4 = arith.constant 0 : index
    %2 = vector.load %arg3[%c0_3, %c0_4] : memref<2x26xf32, #tpu.memory_space<vmem>>, vector<2x26xf32>
    %3 = vector.extract_strided_slice %1 {offsets = [0, 0], sizes = [25, 2], strides = [1, 1]} : vector<25x4xf32> to vector<25x2xf32>
    %4 = vector.extract_strided_slice %1 {offsets = [0, 2], sizes = [25, 1], strides = [1, 1]} : vector<25x4xf32> to vector<25x1xf32>
    %5 = vector.extract_strided_slice %1 {offsets = [0, 3], sizes = [25, 1], strides = [1, 1]} : vector<25x4xf32> to vector<25x1xf32>
    %6 = arith.mulf %0, %0 : vector<2x64xf32>
    %cst = arith.constant dense<0.000000e+00> : vector<64xf32>
    %7 = vector.multi_reduction <add>, %6, %cst [0] : vector<2x64xf32> to vector<64xf32>
    %8 = vector.shape_cast %7 : vector<64xf32> to vector<1x64xf32>
    %cst_5 = arith.constant dense<0.000000e+00> : vector<25x64xf32>
    %9 = tpu.matmul %3, %0, %cst_5 {dimension_numbers = #tpu.dot_dimension_numbers<[1], [0], [0], [1], [0, 0, 1, 1], [], []>} : vector<25x2xf32>, vector<2x64xf32>, vector<25x64xf32> -> vector<25x64xf32>
    %10 = vector.broadcast %5 : vector<25x1xf32> to vector<25x64xf32>
    %11 = vector.broadcast %8 : vector<1x64xf32> to vector<25x64xf32>
    %12 = arith.mulf %10, %11 : vector<25x64xf32>
    %13 = vector.broadcast %4 : vector<25x1xf32> to vector<25x64xf32>
    %14 = arith.addf %13, %12 : vector<25x64xf32>
    %15 = arith.subf %14, %9 : vector<25x64xf32>
    %cst_6 = arith.constant 0.000000e+00 : f32
    %16 = vector.broadcast %cst_6 : f32 to vector<25x64xf32>
    %17 = arith.maximumf %15, %16 : vector<25x64xf32>
    %cst_7 = arith.constant 0.000000e+00 : f32
    %18 = vector.broadcast %cst_7 : f32 to vector<25x64xf32>
    %19 = arith.subf %18, %17 : vector<25x64xf32>
    %20 = math.exp %19 : vector<25x64xf32>
    %21 = vector.extract_strided_slice %2 {offsets = [0, 0], sizes = [2, 25], strides = [1, 1]} : vector<2x26xf32> to vector<2x25xf32>
    %22 = vector.extract_strided_slice %2 {offsets = [0, 25], sizes = [2, 1], strides = [1, 1]} : vector<2x26xf32> to vector<2x1xf32>
    %cst_8 = arith.constant dense<0.000000e+00> : vector<2x64xf32>
    %23 = tpu.matmul %21, %20, %cst_8 {dimension_numbers = #tpu.dot_dimension_numbers<[1], [0], [0], [1], [0, 0, 1, 1], [], []>} : vector<2x25xf32>, vector<25x64xf32>, vector<2x64xf32> -> vector<2x64xf32>
    %24 = vector.broadcast %22 : vector<2x1xf32> to vector<2x64xf32>
    %25 = arith.addf %23, %24 : vector<2x64xf32>
    %c0_9 = arith.constant 0 : index
    %c0_10 = arith.constant 0 : index
    %26 = vector.load %arg4[%c0_9, %c0_10] : memref<2x64xf32, #tpu.memory_space<vmem>>, vector<2x64xf32>
    tpu.vector_store %arg4[%c0_9, %c0_10], %25 {strides = array<i32>} : memref<2x64xf32, #tpu.memory_space<vmem>>, vector<2x64xf32>,
    return
  }
  func.func @transform_0(%arg0: i32) -> (i32, i32) {
    %c0_i32 = arith.constant 0 : i32
    %c0_i32_0 = arith.constant 0 : i32
    return %c0_i32, %arg0 : i32, i32
  }
  func.func @transform_1(%arg0: i32) -> (i32, i32) {
    %c0_i32 = arith.constant 0 : i32
    %c0_i32_0 = arith.constant 0 : i32
    %c0_i32_1 = arith.constant 0 : i32
    return %c0_i32, %c0_i32_0 : i32, i32
  }
  func.func @transform_2(%arg0: i32) -> (i32, i32) {
    %c0_i32 = arith.constant 0 : i32
    %c0_i32_0 = arith.constant 0 : i32
    %c0_i32_1 = arith.constant 0 : i32
    return %c0_i32, %c0_i32_0 : i32, i32
  }
  func.func @transform_3(%arg0: i32) -> (i32, i32) {
    %c0_i32 = arith.constant 0 : i32
    %c0_i32_0 = arith.constant 0 : i32
    return %c0_i32, %arg0 : i32, i32
  }
}

</mosaic_0001>

<llo_original>
// kernel: tpu_custom_call.1
$region0: #{tpu_custom_call.1}
  #allocation0 [shape = 'u32[]', space=smem, size = 0x4, offset = 0x4, fixed_abs, tag = 'smem constant byte address 0x4 - core index']
  #allocation1 [shape = 'u32[72,128]{1,0:T(1,128)}', space=vmem, size = 0x9000, scoped, tag = 'internal scratch']
  %s0 = inlined_call_operand.vmem [shape: f32[2,64], index: 0, kind: input, shape index: {}]
  %s1 = inlined_call_operand.vmem [shape: f32[25,4], index: 1, kind: input, shape index: {}]
  %s2 = inlined_call_operand.vmem [shape: f32[2,26], index: 2, kind: input, shape index: {}]
  %s3 = inlined_call_operand.hbm [shape: f32[2,64], index: 3, kind: output, shape index: {}]
  %s4 = sld [smem:[#allocation0]]
  $region22: #{tpu_custom_call.1} parent=0
    _
  %s6 = ssub.s32 1, %s4
  %s7 = scalar_select 0, %s6, %s4
  $region1: #{tpu_custom_call.1} parent=0
    #allocation2 [shape = 'u8[1024]{0}', space=vmem, size = 0x400, scoped, tag = 'output window, operand 0, single buffered']
    #allocation3 [shape = 's32[1]{0}', space=sflag, size = 0x4, scoped, tag = 'scoped memory for tpu_custom_call.1']
    %8 = vsyncpa [#allocation3], 0
    // Predicated region
    $region2: #{tpu_custom_call.1} parent=1 // pred_check
      _
    $region3: #{tpu_custom_call.1} parent=1 // pred_check_branch
      %10 = sbr.rel (0) target = $region5
    $region4: #{tpu_custom_call.1} parent=1 // pred_region
      _
    $region5: #{tpu_custom_call.1} parent=1 // pred_fallthru
      _
    // Predicated region
    $region6: #{tpu_custom_call.1} parent=1 // pred_check
      _
    $region7: #{tpu_custom_call.1} parent=1 // pred_check_branch
      %12 = sbr.rel (0) target = $region9
    $region8: #{tpu_custom_call.1} parent=1 // pred_region
      _
    $region9: #{tpu_custom_call.1} parent=1 // pred_fallthru
      _
    // Predicated region
    $region10: #{tpu_custom_call.1} parent=1 // pred_check
      _
    $region11: #{tpu_custom_call.1} parent=1 // pred_check_branch
      %14 = sbr.rel (0) target = $region13
    $region12: #{tpu_custom_call.1} parent=1 // pred_region
      _
    $region13: #{tpu_custom_call.1} parent=1 // pred_fallthru
      _
    %v15 = vld [vmem:[%s0] sm:$0x3]
    %v16 = vld [vmem:[%s1] sm:$0xff]
    %v17 = vld [vmem:[%s1 + $0x8] sm:$0xff]
    %v18 = vld [vmem:[%s1 + $0x10] sm:$0xff]
    %v19 = vld [vmem:[%s1 + $0x18] sm:$0x1]
    %v20 = vld [vmem:[%s2] sm:$0x3]
    %v21 = vmul.f32 %v15, %v15
    %vm22 = vcmask 517120
    %v23 = vsel %vm22, %v21, 0.0
    %v24 = vrot.slane %v23, 4
    %v25 = vadd.f32 %v23, %v24
    %v26 = vrot.slane %v25, 2
    %v27 = vadd.f32 %v25, %v26
    %v28 = vrot.slane %v27, 1
    %v29 = vadd.f32 %v27, %v28
    %vm30 = vcmask 15360
    %v32 = vsel %vm30, %v16, 0
    %v35 = vsel %vm30, %v17, 0
    %v38 = vsel %vm30, %v18, 0
    %v41 = vsel %vm30, %v19, 0
    %vm43 = vcmask 1041408
    %v45 = vsel %vm43, %v15, 0
    %47 = vmatpush.msra.mxu0 0.0
    %48 = vmatpush.msra.mxu0 0.0
    %49 = vmatpush.msra.mxu0 0.0
    %50 = vmatpush.msra.mxu0 0.0
    %51 = vmatpush.msra.mxu0 0.0
    %52 = vmatpush.msra.mxu0 0.0
    %53 = vmatpush.msra.mxu0 0.0
    %54 = vmatpush.msra.mxu0 0.0
    %55 = vmatpush.msra.mxu0 0.0
    %56 = vmatpush.msra.mxu0 0.0
    %57 = vmatpush.msra.mxu0 0.0
    %58 = vmatpush.msra.mxu0 0.0
    %59 = vmatpush.msra.mxu0 0.0
    %60 = vmatpush.msra.mxu0 0.0
    %61 = vmatpush.msra.mxu0 0.0
    %62 = vmatpush.msra.mxu0 %v45
    %63 = vmatmul.f32.gmra.mxu0 %v32
    %v64 = vpop.f32.mrf.mxu0
    %v65 = vadd.f32 0.0, %v64
    %66 = vmatmul.f32.gmra.mxu0 %v35
    %v67 = vpop.f32.mrf.mxu0
    %v68 = vadd.f32 0.0, %v67
    %69 = vmatmul.f32.gmra.mxu0 %v38
    %v70 = vpop.f32.mrf.mxu0
    %v71 = vadd.f32 0.0, %v70
    %72 = vmatmul.f32.gmra.mxu0 %v41
    %v73 = vpop.f32.mrf.mxu0
    %v74 = vadd.f32 0.0, %v73
    %75 = vdwg.mxu0
    %76 = vset.pattern.permute.xlu0 3
    %77 = vperm.xlu0 %76, %v16
    %v78 = vpop.permute.xlu0 %77
    %80 = vset.pattern.permute.xlu0 3
    %81 = vperm.xlu0 %80, %v17
    %v82 = vpop.permute.xlu0 %81
    %84 = vset.pattern.permute.xlu0 3
    %85 = vperm.xlu0 %84, %v18
    %v86 = vpop.permute.xlu0 %85
    %88 = vset.pattern.permute.xlu0 3
    %89 = vperm.xlu0 %88, %v19
    %v90 = vpop.permute.xlu0 %89
    %v92 = vmul.f32 %v78, %v29
    %v93 = vmul.f32 %v82, %v29
    %v94 = vmul.f32 %v86, %v29
    %v95 = vmul.f32 %v90, %v29
    %96 = vset.pattern.permute.xlu0 2
    %97 = vperm.xlu0 %96, %v16
    %v98 = vpop.permute.xlu0 %97
    %100 = vset.pattern.permute.xlu0 2
    %101 = vperm.xlu0 %100, %v17
    %v102 = vpop.permute.xlu0 %101
    %104 = vset.pattern.permute.xlu0 2
    %105 = vperm.xlu0 %104, %v18
    %v106 = vpop.permute.xlu0 %105
    %108 = vset.pattern.permute.xlu0 2
    %109 = vperm.xlu0 %108, %v19
    %v110 = vpop.permute.xlu0 %109
    %v112 = vadd.f32 %v98, %v92
    %v113 = vadd.f32 %v102, %v93
    %v114 = vadd.f32 %v106, %v94
    %v115 = vadd.f32 %v110, %v95
    %v116 = vsub.f32 %v112, %v65
    %v117 = vsub.f32 %v113, %v68
    %v118 = vsub.f32 %v114, %v71
    %v119 = vsub.f32 %v115, %v74
    %v120 = vmax.f32 %v116, 0.0
    %v121 = vmax.f32 %v117, 0.0
    %v122 = vmax.f32 %v118, 0.0
    %v123 = vmax.f32 %v119, 0.0
    %v124 = vsub.f32 0.0, %v120
    %v125 = vsub.f32 0.0, %v121
    %v126 = vsub.f32 0.0, %v122
    %v127 = vsub.f32 0.0, %v123
    %v128 = vmul.f32 %v124, 1.442695
    %v129 = vpow.pop %v128
    %v130 = vmul.f32 %v125, 1.442695
    %v131 = vpow.pop %v130
    %v132 = vmul.f32 %v126, 1.442695
    %v133 = vpow.pop %v132
    %v134 = vmul.f32 %v127, 1.442695
    %v135 = vpow.pop %v134
    %137 = vset.pattern.permute.xlu0 25
    %138 = vperm.xlu0 %137, %v20
    %v139 = vpop.permute.xlu0 %138
    %vm141 = vcmask 203776
    %v142 = vsel %vm141, %v20, 0
    %vm144 = vcmask 1040384
    %v146 = vsel %vm144, %v135, 0
    %148 = vmatpush.msra.mxu0 0.0
    %149 = vmatpush.msra.mxu0 0.0
    %150 = vmatpush.msra.mxu0 0.0
    %151 = vmatpush.msra.mxu0 0.0
    %152 = vmatpush.msra.mxu0 0.0
    %153 = vmatpush.msra.mxu0 0.0
    %154 = vmatpush.msra.mxu0 0.0
    %155 = vmatpush.msra.mxu0 0.0
    %156 = vmatpush.msra.mxu0 0.0
    %157 = vmatpush.msra.mxu0 0.0
    %158 = vmatpush.msra.mxu0 0.0
    %159 = vmatpush.msra.mxu0 0.0
    %160 = vmatpush.msra.mxu0 %v146
    %161 = vmatpush.msra.mxu0 %v133
    %162 = vmatpush.msra.mxu0 %v131
    %163 = vmatpush.msra.mxu0 %v129
    %164 = vmatmul.f32.gmra.mxu0 %v142
    %v165 = vpop.f32.mrf.mxu0
    %v166 = vadd.f32 %v139, %v165
    %167 = vdwg.mxu0
    %168 = vst.msk [vmem:[#allocation2] sm:$0x3] %vm22, %v166
    // Predicated region
    $region14: #{tpu_custom_call.1} parent=1 // pred_check
      _
    $region15: #{tpu_custom_call.1} parent=1 // pred_check_branch
      %170 = sbr.rel (0) target = $region17
    $region16: #{tpu_custom_call.1} parent=1 // pred_region
      %172 = vsyncadd [#allocation3], 0
      %s174 = sshll.u32 [#allocation2], 4
      %s175 = int_to_ptr.vmem [resolvable:$true] %s174
      %s176 = sshll.u32 %s3, 4
      %s177 = int_to_ptr.hbm [resolvable:$true] %s176
      %179 = dma.vmem_to_hbm [thread:$0]  %s175, 32, %s177, [#allocation3]
    $region17: #{tpu_custom_call.1} parent=1 // pred_fallthru
      _
    // Predicated region
    $region18: #{tpu_custom_call.1} parent=1 // pred_check
      _
    $region19: #{tpu_custom_call.1} parent=1 // pred_check_branch
      %181 = sbr.rel (0) target = $region21
    $region20: #{tpu_custom_call.1} parent=1 // pred_region
      %183 = dma.done [#allocation3], 32
    $region21: #{tpu_custom_call.1} parent=1 // pred_fallthru
      _
    %184 = vsyncpa [#allocation3], 1

</llo_original>
